<compile_context>
chip_gen: v7x
topology: tpu7x:2x2x1
jax: 0.10.0
libtpu: 0.0.40
codegen_flags: <defaults>
</compile_context>

<pallas_src>
import functools

import jax
import jax.numpy as jnp
from jax.experimental import pallas as pl
from jax.experimental.pallas import tpu as pltpu


def _round_up(x, m):
    return ((x + m - 1) // m) * m


def _leftpad_conv1d_kernel(x_ref, w_ref, b_ref, o_ref, *, kernel_size, tl, winlen):
    # x_ref: (1, C_in, L_in)   full (padded) sequence, resident per batch elt
    # w_ref: (C_out, K*C_in)   fused weight slab
    # b_ref: (C_out, 1)
    # o_ref: (1, C_out, TL)    one lane-dense time tile of the NCL output
    j = pl.program_id(1)
    start = pl.multiple_of(j * tl, 128)
    window = x_ref[0, :, pl.ds(start, winlen)]              # (C_in, WINLEN)

    # im2col: slab k holds `window` shifted left by k lanes (tap k), built with
    # XLU lane rolls + aligned prefix slices (no unaligned slice starts).
    slabs = [window[:, :tl]]
    for k in range(1, kernel_size):
        slabs.append(pltpu.roll(window, shift=winlen - k, axis=1)[:, :tl])
    xc = jnp.concatenate(slabs, axis=0)                     # (K*C_in, TL)

    # Single fused MXU contraction over K*C_in, f32 accumulation, bias add.
    acc = jnp.dot(w_ref[...], xc, preferred_element_type=jnp.float32)
    acc = acc + b_ref[...].astype(jnp.float32)
    o_ref[0] = acc.astype(o_ref.dtype)


def leftpad_conv1d(x, weight, bias, padding, *, tl_target=512):
    """x: (B, C_in, L) float32 (PyTorch NCL). weight: (C_out, C_in, K). bias: (C_out,)."""
    b, c_in, l = x.shape
    c_out, _, k = weight.shape
    l_out = l + padding - k + 1

    # Time tile: multiple of 128 (lane-dense output stores); halo rounded to 128.
    tl = min(tl_target, _round_up(l_out, 128))
    n_lt = pl.cdiv(l_out, tl)
    halo = _round_up(k - 1, 128)
    winlen = tl + halo

    # One fused pad: `padding` zeros on the left (causal pad) plus zeros on the
    # right so every tile's halo window stays in bounds and lanes are aligned.
    l_in = _round_up(max(padding + l, (n_lt - 1) * tl + winlen), 128)
    x_in = jnp.pad(x, ((0, 0), (0, 0), (padding, l_in - l - padding)))

    # Fused weight slab: w2[co, k*C_in + ci] = weight[co, ci, k]  (tiny array).
    w2 = jnp.transpose(weight, (0, 2, 1)).reshape(c_out, k * c_in)
    b2 = bias.reshape(c_out, 1)

    kernel = functools.partial(
        _leftpad_conv1d_kernel, kernel_size=k, tl=tl, winlen=winlen)

    # TODO(synk): for very large C_in * L the resident (C_in, L_in) input row
    # should be replaced by manual halo-window DMAs (pl.ANY + make_async_copy)
    # to bound VMEM; not needed at these module sizes.
    return pl.pallas_call(
        kernel,
        out_shape=jax.ShapeDtypeStruct((b, c_out, l_out), x.dtype),
        grid_spec=pltpu.PrefetchScalarGridSpec(
            num_scalar_prefetch=0,
            grid=(b, n_lt),
            in_specs=[
                pl.BlockSpec((1, c_in, l_in), lambda i, j: (i, 0, 0)),
                pl.BlockSpec((c_out, k * c_in), lambda i, j: (0, 0)),
                pl.BlockSpec((c_out, 1), lambda i, j: (0, 0)),
            ],
            out_specs=pl.BlockSpec((1, c_out, tl), lambda i, j: (i, 0, j)),
        ),
        compiler_params=pltpu.CompilerParams(
            dimension_semantics=("parallel", "parallel")),
    )(x_in, w2, b2)


def _reference(x, weight, bias, padding):
    # Pure-JAX reference (conv_general_dilated) for correctness check.
    x_pad = jnp.pad(x, ((0, 0), (0, 0), (padding, 0)))
    y = jax.lax.conv_general_dilated(
        x_pad, weight, window_strides=(1,), padding="VALID",
        dimension_numbers=("NCH", "OIH", "NCH"))
    return y + bias[None, :, None]


if __name__ == "__main__":
    # Module hyperparams (causal conv: padding = kernel_size - 1).
    in_channels, out_channels, kernel_size, padding = 4, 6, 3, 2
    batch, length = 2, 16

    key = jax.random.PRNGKey(0)
    kx, kw, kb = jax.random.split(key, 3)

    # Deterministic init mirroring nn.Conv1d: U(-bound, bound), bound = 1/sqrt(C_in*K)
    bound = 1.0 / (in_channels * kernel_size) ** 0.5
    weight = jax.random.uniform(
        kw, (out_channels, in_channels, kernel_size),
        minval=-bound, maxval=bound, dtype=jnp.float32)
    bias = jax.random.uniform(
        kb, (out_channels,), minval=-bound, maxval=bound, dtype=jnp.float32)

    x = jax.random.normal(kx, (batch, in_channels, length), dtype=jnp.float32)

    y = leftpad_conv1d(x, weight, bias, padding)
    jax.block_until_ready(y)

    y_ref = _reference(x, weight, bias, padding)
    assert y.shape == (batch, out_channels, length + padding - kernel_size + 1)
    assert jnp.allclose(y, y_ref, atol=1e-5, rtol=1e-5), float(
        jnp.max(jnp.abs(y - y_ref)))
    print("KERNEL_OK")
</pallas_src>

<mosaic_0001>
module attributes {stable_mosaic.version = 11 : i64} {
  func.func @_leftpad_conv1d_kernel(%arg0: i32, %arg1: i32, %arg2: memref<1x4x256xf32, #tpu.memory_space<vmem>>, %arg3: memref<6x12xf32, #tpu.memory_space<vmem>>, %arg4: memref<6x1xf32, #tpu.memory_space<vmem>>, %arg5: memref<1x6x128xf32, #tpu.memory_space<vmem>>) attributes {dimension_semantics = [#tpu.dimension_semantics<parallel>, #tpu.dimension_semantics<parallel>], iteration_bounds = array<i64: 2, 1>, scalar_prefetch = 0 : i64, scratch_operands = 0 : i64, tpu.core_type = #tpu.core_type<tc>, window_params = [{transform_indices = @transform_0, window_bounds = array<i64: 1, 4, 256>}, {pipeline_mode = #tpu.pipeline_mode<synchronous>, transform_indices = @transform_1, window_bounds = array<i64: 6, 12>}, {pipeline_mode = #tpu.pipeline_mode<synchronous>, transform_indices = @transform_2, window_bounds = array<i64: 6, 1>}, {transform_indices = @transform_3, window_bounds = array<i64: 1, 6, 128>}]} {
    %c128_i32 = arith.constant 128 : i32
    %0 = arith.muli %arg1, %c128_i32 : i32
    %1 = tpu.assume_multiple %0, 128 : i32
    %c0 = arith.constant 0 : index
    %c0_0 = arith.constant 0 : index
    %2 = arith.index_cast %1 : i32 to index
    %3 = vector.load %arg2[%c0, %c0_0, %2] : memref<1x4x256xf32, #tpu.memory_space<vmem>>, vector<1x4x256xf32>
    %4 = vector.shape_cast %3 : vector<1x4x256xf32> to vector<4x256xf32>
    %5 = vector.extract_strided_slice %4 {offsets = [0, 0], sizes = [4, 128], strides = [1, 1]} : vector<4x256xf32> to vector<4x128xf32>
    %c255_i32 = arith.constant 255 : i32
    %6 = tpu.dynamic_rotate %4 by %c255_i32 dim 1 : vector<4x256xf32>, i32 -> vector<4x256xf32>
    %7 = vector.extract_strided_slice %6 {offsets = [0, 0], sizes = [4, 128], strides = [1, 1]} : vector<4x256xf32> to vector<4x128xf32>
    %c254_i32 = arith.constant 254 : i32
    %8 = tpu.dynamic_rotate %4 by %c254_i32 dim 1 : vector<4x256xf32>, i32 -> vector<4x256xf32>
    %9 = vector.extract_strided_slice %8 {offsets = [0, 0], sizes = [4, 128], strides = [1, 1]} : vector<4x256xf32> to vector<4x128xf32>
    %10 = tpu.concatenate %5, %7, %9 in 0 : vector<4x128xf32>, vector<4x128xf32>, vector<4x128xf32> -> vector<12x128xf32>
    %c0_1 = arith.constant 0 : index
    %c0_2 = arith.constant 0 : index
    %11 = vector.load %arg3[%c0_1, %c0_2] : memref<6x12xf32, #tpu.memory_space<vmem>>, vector<6x12xf32>
    %cst = arith.constant dense<0.000000e+00> : vector<6x128xf32>
    %12 = tpu.matmul %11, %10, %cst {dimension_numbers = #tpu.dot_dimension_numbers<[1], [0], [0], [1], [0, 0, 1, 1], [], []>} : vector<6x12xf32>, vector<12x128xf32>, vector<6x128xf32> -> vector<6x128xf32>
    %c0_3 = arith.constant 0 : index
    %c0_4 = arith.constant 0 : index
    %13 = vector.load %arg4[%c0_3, %c0_4] : memref<6x1xf32, #tpu.memory_space<vmem>>, vector<6x1xf32>
    %14 = vector.broadcast %13 : vector<6x1xf32> to vector<6x128xf32>
    %15 = arith.addf %12, %14 : vector<6x128xf32>
    %c0_5 = arith.constant 0 : index
    %c0_6 = arith.constant 0 : index
    %c0_7 = arith.constant 0 : index
    %16 = vector.load %arg5[%c0_5, %c0_6, %c0_7] : memref<1x6x128xf32, #tpu.memory_space<vmem>>, vector<1x6x128xf32>
    %17 = vector.shape_cast %16 : vector<1x6x128xf32> to vector<6x128xf32>
    %18 = vector.shape_cast %15 : vector<6x128xf32> to vector<1x6x128xf32>
    tpu.vector_store %arg5[%c0_5, %c0_6, %c0_7], %18 {strides = array<i32>} : memref<1x6x128xf32, #tpu.memory_space<vmem>>, vector<1x6x128xf32>,
    return
  }
  func.func @transform_0(%arg0: i32, %arg1: i32) -> (i32, i32, i32) {
    %c0_i32 = arith.constant 0 : i32
    %c0_i32_0 = arith.constant 0 : i32
    %c0_i32_1 = arith.constant 0 : i32
    return %arg0, %c0_i32, %c0_i32_0 : i32, i32, i32
  }
  func.func @transform_1(%arg0: i32, %arg1: i32) -> (i32, i32) {
    %c0_i32 = arith.constant 0 : i32
    %c0_i32_0 = arith.constant 0 : i32
    %c0_i32_1 = arith.constant 0 : i32
    return %c0_i32, %c0_i32_0 : i32, i32
  }
  func.func @transform_2(%arg0: i32, %arg1: i32) -> (i32, i32) {
    %c0_i32 = arith.constant 0 : i32
    %c0_i32_0 = arith.constant 0 : i32
    %c0_i32_1 = arith.constant 0 : i32
    return %c0_i32, %c0_i32_0 : i32, i32
  }
  func.func @transform_3(%arg0: i32, %arg1: i32) -> (i32, i32, i32) {
    %c0_i32 = arith.constant 0 : i32
    %c0_i32_0 = arith.constant 0 : i32
    return %arg0, %c0_i32, %arg1 : i32, i32, i32
  }
}

</mosaic_0001>

<llo_original>
// kernel: tpu_custom_call.1
$region0: #{tpu_custom_call.1}
  #allocation0 [shape = 'u32[]', space=smem, size = 0x4, offset = 0x4, fixed_abs, tag = 'smem constant byte address 0x4 - core index']
  #allocation1 [shape = 'u32[144,128]{1,0:T(1,128)}', space=vmem, size = 0x12000, scoped, tag = 'internal scratch']
  %s0 = inlined_call_operand.hbm [shape: f32[2,4,256], index: 0, kind: input, shape index: {}]
  %s1 = inlined_call_operand.vmem [shape: f32[6,12], index: 1, kind: input, shape index: {}]
  %s2 = inlined_call_operand.vmem [shape: f32[6,1], index: 2, kind: input, shape index: {}]
  %s3 = inlined_call_operand.vmem [shape: f32[2,6,16], index: 3, kind: output, shape index: {}]
  %s4 = sld [smem:[#allocation0]]
  $region49: #{tpu_custom_call.1} parent=0
    _
  %s6 = ssub.s32 1, %s4
  %s7 = scalar_select 0, %s6, %s4
  $region1: #{tpu_custom_call.1} parent=0
    #allocation2 [shape = 'u8[8192]{0}', space=vmem, size = 0x2000, scoped, tag = 'input window, operand 0']
    #allocation3 [shape = 's32[2]{0}', space=sflag, size = 0x8, scoped, tag = 'scoped memory for tpu_custom_call.1']
    %8 = vsyncpa [#allocation3], 0
    %s9 = scalar_lea.sflag [#allocation3], 1
    %10 = vsyncpa %s9, 0
    loop: start=0, step=1, limit=4
    $region2: #{tpu_custom_call.1} parent=1 // loop_pre_header
      _
    $region3: #{tpu_custom_call.1} parent=1 // loop_header
      %s12 = sphi 0, %s16
      %p13 = scmp.ge.s32.totalorder %s12, 4
      %s19 = sphi 0, %s31
      %s20 = sphi 0, %s27
      %s21 = sphi 0, %s19
      %s22 = sphi 0, %s20
      %s23 = sphi 0, %s21
      %s24 = sphi 0, %s22
      %s34 = sphi 0, %s36
      %s37 = sphi 0, %s34
      %s38 = sphi 0, %s37
      %s54 = sphi 0, %s38
      %s58 = sphi 0, %s58
      %s60 = sphi 0, %s58
      %s61 = sphi 0, %s60
      %s75 = sphi 0, %s61
      %s79 = sphi 0, %s79
      %s81 = sphi 0, %s79
      %s82 = sphi 0, %s81
      %s96 = sphi 0, %s82
      %s104 = sphi 0, %s106
      %s107 = sphi 0, %s104
      %s108 = sphi 0, %s107
      %s124 = sphi 0, %s108
    $region4: #{tpu_custom_call.1} parent=1 // loop_header_branch
      %15 = sbr.rel (%p13) target = $region8
    $region5: #{tpu_custom_call.1} parent=1 // loop_body
      %s17 = ssub.s32 %s12, 1
      %s18 = ssub.s32 %s12, 2
      %s25 = sadd.s32 1, %s20
      %p26 = scmp.ge.s32.totalorder %s25, 1
      %s27 = scalar_select %p26, 0, %s25
      %s28 = sadd.s32 1, %s19
      %s29 = scalar_select %p26, %s28, %s19
      %p30 = scmp.ge.s32.totalorder %s29, 2
      %s31 = scalar_select %p30, 0, %s29
      %s32 = ssub.s32 %s19, %s31
      %p33 = scmp.eq.s32.totalorder %s32, 0
      %s35 = sadd.s32 %s34, 1
      %s36 = scalar_select %p33, %s34, %s35
      %p39 = pneg %p33
      %p40 = scmp.eq.s32.totalorder %s12, 1
      %p41 = por %p39, %p40
      %p42 = scmp.ne.s32.totalorder %s34, %s37
      %p43 = scmp.eq.s32.totalorder %s12, 0
      %p44 = por %p42, %p43
      %p45 = scmp.ne.s32.totalorder %s34, %s37
      %p46 = scmp.eq.s32.totalorder %s17, 1
      %p47 = por %p45, %p46
      %p48 = scmp.ne.s32.totalorder %s37, %s38
      %p49 = scmp.eq.s32.totalorder %s17, 0
      %p50 = por %p48, %p49
      %p51 = scmp.ne.s32.totalorder %s37, %s38
      %p52 = scmp.eq.s32.totalorder %s18, 1
      %p53 = por %p51, %p52
      %p55 = scmp.ne.s32.totalorder %s38, %s54
      %p56 = scmp.eq.s32.totalorder %s18, 0
      %p57 = por %p55, %p56
      %s59 = sadd.s32 %s58, 1
      %p62 = scmp.eq.s32.totalorder %s12, 1
      %p63 = scmp.ne.s32.totalorder %s58, %s60
      %p64 = scmp.eq.s32.totalorder %s12, 0
      %p65 = por %p63, %p64
      %p66 = scmp.ne.s32.totalorder %s58, %s60
      %p67 = scmp.eq.s32.totalorder %s17, 1
      %p68 = por %p66, %p67
      %p69 = scmp.ne.s32.totalorder %s60, %s61
      %p70 = scmp.eq.s32.totalorder %s17, 0
      %p71 = por %p69, %p70
      %p72 = scmp.ne.s32.totalorder %s60, %s61
      %p73 = scmp.eq.s32.totalorder %s18, 1
      %p74 = por %p72, %p73
      %p76 = scmp.ne.s32.totalorder %s61, %s75
      %p77 = scmp.eq.s32.totalorder %s18, 0
      %p78 = por %p76, %p77
      %s80 = sadd.s32 %s79, 1
      %p83 = scmp.eq.s32.totalorder %s12, 1
      %p84 = scmp.ne.s32.totalorder %s79, %s81
      %p85 = scmp.eq.s32.totalorder %s12, 0
      %p86 = por %p84, %p85
      %p87 = scmp.ne.s32.totalorder %s79, %s81
      %p88 = scmp.eq.s32.totalorder %s17, 1
      %p89 = por %p87, %p88
      %p90 = scmp.ne.s32.totalorder %s81, %s82
      %p91 = scmp.eq.s32.totalorder %s17, 0
      %p92 = por %p90, %p91
      %p93 = scmp.ne.s32.totalorder %s81, %s82
      %p94 = scmp.eq.s32.totalorder %s18, 1
      %p95 = por %p93, %p94
      %p97 = scmp.ne.s32.totalorder %s82, %s96
      %p98 = scmp.eq.s32.totalorder %s18, 0
      %p99 = por %p97, %p98
      %s100 = ssub.s32 %s19, %s31
      %s101 = ssub.s32 %s20, %s27
      %s102 = sor.u32 %s100, %s101
      %p103 = scmp.eq.s32.totalorder %s102, 0
      %s105 = sadd.s32 %s104, 1
      %s106 = scalar_select %p103, %s104, %s105
      %p109 = pneg %p103
      %p110 = scmp.eq.s32.totalorder %s12, 1
      %p111 = por %p109, %p110
      %p112 = scmp.ne.s32.totalorder %s104, %s107
      %p113 = scmp.eq.s32.totalorder %s12, 0
      %p114 = por %p112, %p113
      %p115 = scmp.ne.s32.totalorder %s104, %s107
      %p116 = scmp.eq.s32.totalorder %s17, 1
      %p117 = por %p115, %p116
      %p118 = scmp.ne.s32.totalorder %s107, %s108
      %p119 = scmp.eq.s32.totalorder %s17, 0
      %p120 = por %p118, %p119
      %p121 = scmp.ne.s32.totalorder %s107, %s108
      %p122 = scmp.eq.s32.totalorder %s18, 1
      %p123 = por %p121, %p122
      %p125 = scmp.ne.s32.totalorder %s108, %s124
      %p126 = scmp.eq.s32.totalorder %s18, 0
      %p127 = por %p125, %p126
      %p128 = scmp.le.s32.totalorder 1, %s12
      %p129 = scmp.lt.s32.totalorder %s12, 3
      %p130 = pnand %p128, %p129
      %p131 = pneg %p130
      // Predicated region
      $region9: #{tpu_custom_call.1} parent=5 // pred_check
        _
      $region10: #{tpu_custom_call.1} parent=5 // pred_check_branch
        %133 = sbr.rel (%p130) target = $region12
      $region11: #{tpu_custom_call.1} parent=5 // pred_region
        %s134 = ssub.s32 %s12, 1
        // Predicated region
        $region13: #{tpu_custom_call.1} parent=11 // pred_check
          %p135 = pneg %p71
        $region14: #{tpu_custom_call.1} parent=11 // pred_check_branch
          %137 = sbr.rel (%p135) target = $region16
        $region15: #{tpu_custom_call.1} parent=11 // pred_region
          _
        $region16: #{tpu_custom_call.1} parent=11 // pred_fallthru
          _
        // Predicated region
        $region17: #{tpu_custom_call.1} parent=11 // pred_check
          %p138 = pneg %p92
        $region18: #{tpu_custom_call.1} parent=11 // pred_check_branch
          %140 = sbr.rel (%p138) target = $region20
        $region19: #{tpu_custom_call.1} parent=11 // pred_region
          _
        $region20: #{tpu_custom_call.1} parent=11 // pred_fallthru
          _
      $region12: #{tpu_custom_call.1} parent=5 // pred_fallthru
        _
      %p141 = scmp.lt.s32.totalorder %s12, 2
      // Predicated region
      $region21: #{tpu_custom_call.1} parent=5 // pred_check
        %p142 = pneg %p141
      $region22: #{tpu_custom_call.1} parent=5 // pred_check_branch
        %144 = sbr.rel (%p142) target = $region24
      $region23: #{tpu_custom_call.1} parent=5 // pred_region
        // Predicated region
        $region25: #{tpu_custom_call.1} parent=23 // pred_check
          %p145 = pneg %p44
        $region26: #{tpu_custom_call.1} parent=23 // pred_check_branch
          %147 = sbr.rel (%p145) target = $region28
        $region27: #{tpu_custom_call.1} parent=23 // pred_region
          %s148 = sand.u32 %s34, 1
          %s149 = scalar_lea.sflag [#allocation3], %s148
          %s150 = sand.u32 %s34, 1
          %s151 = smul.addr %s150, 8
          %s152 = scalar_lea.vmem [#allocation2], %s151
          %s154 = ssub.s32 128, 128
          %155 = vsyncadd %s149, %s154
          %s156 = smul.addr %s19, 2
          %s157 = smul.addr %s156, 64
          %s158 = scalar_lea.hbm %s0, %s157
          %s160 = sshll.u32 %s152, 4
          %s161 = int_to_ptr.vmem [resolvable:$true] %s160
          %163 = dma.hbm_to_vmem [thread:$0]  %s158, 128, %s161, %s149
        $region28: #{tpu_custom_call.1} parent=23 // pred_fallthru
          _
      $region24: #{tpu_custom_call.1} parent=5 // pred_fallthru
        _
      %p164 = scmp.le.s32.totalorder 1, %s12
      %p165 = scmp.lt.s32.totalorder %s12, 3
      %p166 = pnand %p164, %p165
      %p167 = pneg %p166
      // Predicated region
      $region29: #{tpu_custom_call.1} parent=5 // pred_check
        _
      $region30: #{tpu_custom_call.1} parent=5 // pred_check_branch
        %169 = sbr.rel (%p166) target = $region32
      $region31: #{tpu_custom_call.1} parent=5 // pred_region
        %s170 = ssub.s32 %s12, 1
        %s171 = sand.u32 %s37, 1
        %s172 = scalar_lea.sflag [#allocation3], %s171
        %s173 = sand.u32 %s37, 1
        %s174 = smul.addr %s173, 8
        %s175 = scalar_lea.vmem [#allocation2], %s174
        // Predicated region
        $region33: #{tpu_custom_call.1} parent=31 // pred_check
          %p176 = pneg %p50
        $region34: #{tpu_custom_call.1} parent=31 // pred_check_branch
          %178 = sbr.rel (%p176) target = $region36
        $region35: #{tpu_custom_call.1} parent=31 // pred_region
          %179 = dma.done %s172, 128
        $region36: #{tpu_custom_call.1} parent=31 // pred_fallthru
          _
        %s180 = sand.u32 %s37, 1
        %s181 = scalar_lea.sflag [#allocation3], %s180
        %s182 = sand.u32 %s37, 1
        %s183 = smul.addr %s182, 8
        %s184 = scalar_lea.vmem [#allocation2], %s183
        %p185 = pneg %p50
        %p186 = pneg %p47
        %p187 = pneg %p71
        %p188 = pneg %p68
        %p189 = pneg %p92
        %p190 = pneg %p89
        %p191 = pneg %p120
        %p192 = pneg %p117
        %p193 = scmp.lt.s32.totalorder %s21, 1
        %s194 = scalar_select %p193, %s21, 1
        %p195 = scmp.lt.s32.totalorder %s22, 0
        %s196 = scalar_select %p195, %s22, 0
        %s197 = sadd.s32 %s196, %s194
        %s198 = smul.addr %s197, 8
        %s199 = scalar_lea.vmem %s3, %s198
        %p200 = scmp.lt.s32.totalorder %s21, 1
        %s201 = scalar_select %p200, %s21, 1
        %p202 = scmp.lt.s32.totalorder %s22, 0
        %s203 = scalar_select %p202, %s22, 0
        %s204 = sadd.s32 %s203, %s201
        %s205 = smul.addr %s204, 8
        %s206 = scalar_lea.vmem %s3, %s205
        %s207 = smul.u32 %s22, 128
        %s208 = sshra.s32 %s207, 7
        %s209 = sand.u32 %s207, 127
        %s210 = smul.addr %s208, 4
        %s211 = scalar_lea.vmem %s175, %s210 [#allocation2]
        %v212 = vld [vmem:[%s211] sm:$0xff]
        %v214 = vcombine.high %v212, %v212
        %216 = vrot.lane.b32.xlu0 %v212, 127
        %v217 = vpop.permute.xlu0 %216
        %218 = vrot.lane.b32.xlu0 %v214, 127
        %v219 = vpop.permute.xlu0 %218
        %v220 = vlaneseq
        %v221 = vand.u32 %v220, 127
        %vm222 = vcmp.lt.s32.totalorder %v221, 127
        %v223 = vsel %vm222, %v217, %v219
        %224 = vrot.lane.b32.xlu0 %v212, 126
        %v225 = vpop.permute.xlu0 %224
        %226 = vrot.lane.b32.xlu0 %v214, 126
        %v227 = vpop.permute.xlu0 %226
        %vm228 = vcmp.lt.s32.totalorder %v221, 126
        %v229 = vsel %vm228, %v225, %v227
        %v231 = vrot.slane %v223, 4
        %vm233 = vcmask 1043456
        %v234 = vsel %vm233, %v212, %v231
        %v235 = vld [vmem:[%s1] sm:$0x3f]
        %v236 = vld [vmem:[%s2] sm:$0x3f]
        %238 = vset.pattern.permute.xlu0 0
        %239 = vperm.xlu0 %238, %v236
        %v240 = vpop.permute.xlu0 %239
        %vm242 = vcmask 97280
        %v244 = vsel %vm242, %v235, 0
        %v247 = vsel %vm233, %v229, 0
        %249 = vmatprep.subr.mxu0 0.0
        %250 = vmatpush1.msra.mxu0 %v234
        %251 = vmatprep.subr.mxu0 0.0
        %252 = vmatpush1.msra.mxu0 %v247
        %253 = vmatprep.subr.mxu0 0.0
        %254 = vmatpush1.msra.mxu0 0.0
        %255 = vmatprep.subr.mxu0 0.0
        %256 = vmatpush1.msra.mxu0 0.0
        %257 = vmatprep.subr.mxu0 0.0
        %258 = vmatpush1.msra.mxu0 0.0
        %259 = vmatprep.subr.mxu0 0.0
        %260 = vmatpush1.msra.mxu0 0.0
        %261 = vmatprep.subr.mxu0 0.0
        %262 = vmatpush1.msra.mxu0 0.0
        %263 = vmatprep.subr.mxu0 0.0
        %264 = vmatpush1.msra.mxu0 0.0
        %265 = vmatprep.subr.mxu0 0.0
        %266 = vmatpush1.msra.mxu0 0.0
        %267 = vmatprep.subr.mxu0 0.0
        %268 = vmatpush1.msra.mxu0 0.0
        %269 = vmatprep.subr.mxu0 0.0
        %270 = vmatpush1.msra.mxu0 0.0
        %271 = vmatprep.subr.mxu0 0.0
        %272 = vmatpush1.msra.mxu0 0.0
        %273 = vmatprep.subr.mxu0 0.0
        %274 = vmatpush1.msra.mxu0 0.0
        %275 = vmatprep.subr.mxu0 0.0
        %276 = vmatpush1.msra.mxu0 0.0
        %277 = vmatprep.subr.mxu0 0.0
        %278 = vmatpush1.msra.mxu0 0.0
        %279 = vmatprep.subr.mxu0 0.0
        %280 = vmatpush1.msra.mxu0 0.0
        %281 = vmatprep.subr.mxu0 0.0
        %282 = vmatpush1.msra.mxu0 0.0
        %283 = vmatprep.subr.mxu0 0.0
        %284 = vmatpush1.msra.mxu0 0.0
        %285 = vmatprep.subr.mxu0 0.0
        %286 = vmatpush1.msra.mxu0 0.0
        %287 = vmatprep.subr.mxu0 0.0
        %288 = vmatpush1.msra.mxu0 0.0
        %289 = vmatprep.subr.mxu0 0.0
        %290 = vmatpush1.msra.mxu0 0.0
        %291 = vmatprep.subr.mxu0 0.0
        %292 = vmatpush1.msra.mxu0 0.0
        %293 = vmatprep.subr.mxu0 0.0
        %294 = vmatpush1.msra.mxu0 0.0
        %295 = vmatprep.subr.mxu0 0.0
        %296 = vmatpush1.msra.mxu0 0.0
        %297 = vmatprep.subr.mxu0 0.0
        %298 = vmatpush1.msra.mxu0 0.0
        %299 = vmatprep.subr.mxu0 0.0
        %300 = vmatpush1.msra.mxu0 0.0
        %301 = vmatprep.subr.mxu0 0.0
        %302 = vmatpush1.msra.mxu0 0.0
        %303 = vmatprep.subr.mxu0 0.0
        %304 = vmatpush1.msra.mxu0 0.0
        %305 = vmatprep.subr.mxu0 0.0
        %306 = vmatpush1.msra.mxu0 0.0
        %307 = vmatprep.subr.mxu0 0.0
        %308 = vmatpush1.msra.mxu0 0.0
        %309 = vmatprep.subr.mxu0 0.0
        %310 = vmatpush1.msra.mxu0 0.0
        %311 = vmatprep.subr.mxu0 0.0
        %312 = vmatpush1.msra.mxu0 0.0
        %313 = vmatprep.mubr.f32.mxu0 0.0
        %314 = vmatmul.mubr.f32.gmra.mrb[0].mxu0 %v244
        %v315 = vpop.f32.mrb[0].mxu0
        %v316 = vadd.f32 %v240, %v315
        %v317 = vpop.f32.mrb[0].mxu0
        %318 = vdwg.mxu0
        %319 = vst [vmem:[%s206] sm:$0x3f] %v316
        %p320 = scmp.lt.s32.totalorder %s21, 1
        %s321 = scalar_select %p320, %s21, 1
        %p322 = scmp.lt.s32.totalorder %s22, 0
        %s323 = scalar_select %p322, %s22, 0
        %s324 = sadd.s32 %s323, %s321
        %s325 = smul.addr %s324, 8
        %s326 = scalar_lea.vmem %s3, %s325
        // Predicated region
        $region37: #{tpu_custom_call.1} parent=31 // pred_check
          %p327 = pneg %p117
        $region38: #{tpu_custom_call.1} parent=31 // pred_check_branch
          %329 = sbr.rel (%p327) target = $region40
        $region39: #{tpu_custom_call.1} parent=31 // pred_region
          _
        $region40: #{tpu_custom_call.1} parent=31 // pred_fallthru
          _
      $region32: #{tpu_custom_call.1} parent=5 // pred_fallthru
        _
      %p330 = scmp.le.s32.totalorder 2, %s12
      // Predicated region
      $region41: #{tpu_custom_call.1} parent=5 // pred_check
        %p331 = pneg %p330
      $region42: #{tpu_custom_call.1} parent=5 // pred_check_branch
        %333 = sbr.rel (%p331) target = $region44
      $region43: #{tpu_custom_call.1} parent=5 // pred_region
        %s334 = ssub.s32 %s12, 2
        // Predicated region
        $region45: #{tpu_custom_call.1} parent=43 // pred_check
          %p335 = pneg %p123
        $region46: #{tpu_custom_call.1} parent=43 // pred_check_branch
          %337 = sbr.rel (%p335) target = $region48
        $region47: #{tpu_custom_call.1} parent=43 // pred_region
          %p338 = scmp.lt.s32.totalorder %s23, 1
          %s339 = scalar_select %p338, %s23, 1
          %p340 = scmp.lt.s32.totalorder %s24, 0
          %s341 = scalar_select %p340, %s24, 0
          %s342 = sadd.s32 %s341, %s339
          %s343 = smul.addr %s342, 8
          %s344 = scalar_lea.vmem %s3, %s343
        $region48: #{tpu_custom_call.1} parent=43 // pred_fallthru
          _
      $region44: #{tpu_custom_call.1} parent=5 // pred_fallthru
        _
    $region6: #{tpu_custom_call.1} parent=1 // loop_footer
      %s16 = sadd.s32 1, %s12
    $region7: #{tpu_custom_call.1} parent=1 // loop_footer_branch
      %11 = sbr.rel target = $region3
    $region8: #{tpu_custom_call.1} parent=1 // loop_exit
      _
    %345 = vsyncpa [#allocation3], 1
    %s346 = scalar_lea.sflag [#allocation3], 1
    %347 = vsyncpa %s346, 1

</llo_original>
